<compile_context>
chip_gen: v7x
topology: tpu7x:2x2x1
jax: 0.10.0
libtpu: 0.0.40
codegen_flags: <defaults>
</compile_context>

<pallas_src>
import functools

import jax
import jax.numpy as jnp
from jax.experimental import pallas as pl
from jax.experimental.pallas import tpu as pltpu


def _ceil_to(x, m):
    return -(-x // m) * m


def _sepconv_kernel(x_ref, a_ref, b_ref, o_ref, *, ksize, stride, wpc, n_imgs, ho):
    # x_ref : (N, Hq, stride*WpC_pad)  padded input, rows grouped by residue:
    #         x_ref[n, q, r*WpC_pad + c] == x_padded[n, q*stride + r, c]
    # a_ref : (k*WpC_pad, WoC_pad)     folded depthwise+pointwise weights
    # b_ref : (1, WoC_pad)             folded bias, tiled over Wo (f32)
    # o_ref : (N*Ho, WoC_pad)          lane-dense output
    lhs_imgs = []
    for n in range(n_imgs):                      # N is tiny; statically unrolled
        slabs = []
        for kh in range(ksize):
            q0, r = kh // stride, kh % stride
            # Contiguous, 128-aligned read of exactly the Ho rows this tap needs.
            slabs.append(x_ref[n, pl.ds(q0, ho), pl.ds(r * wpc, wpc)])
        lhs_imgs.append(jnp.concatenate(slabs, axis=-1))     # (Ho, k*WpC_pad)
    lhs = jnp.concatenate(lhs_imgs, axis=0)                  # (N*Ho, k*WpC_pad)

    # Single MXU matmul; accumulation stays in the MXU (f32 accumulate).
    acc = jnp.dot(lhs, a_ref[...], preferred_element_type=jnp.float32)
    o_ref[...] = (acc + b_ref[...]).astype(o_ref.dtype)


def sepconv_prepare(dw_w, dw_b, pw_w, pw_b, *, H, W, stride, padding,
                    compute_dtype=jnp.float32):
    """Fold depthwise+pointwise weights into one matmul operand.

    Run once per weight update (out of the per-forward hot path).
    dw_w: (Cin,1,k,k), dw_b: (Cin,), pw_w: (Cout,Cin,1,1), pw_b: (Cout,).
    Returns (A, b_tile) with A: (k*WpC_pad, WoC_pad), b_tile: (1, WoC_pad) f32.
    """
    Cin, _, k, _ = dw_w.shape
    Cout = pw_w.shape[0]
    Hp, Wp = H + 2 * padding, W + 2 * padding
    Wo = (Wp - k) // stride + 1
    WpC, WoC = Wp * Cin, Wo * Cout
    WpC_pad, WoC_pad = _ceil_to(WpC, 128), _ceil_to(WoC, 128)

    dw = jnp.transpose(dw_w[:, 0, :, :], (1, 2, 0))           # (k, k, Cin)
    pw = jnp.transpose(pw_w[:, :, 0, 0], (1, 0))              # (Cin, Cout)
    w_comb = dw[..., None] * pw[None, None]                   # (k, k, Cin, Cout)

    # Selection matrix P[kw, ip, w] = 1 iff ip == w*stride + kw
    ip_idx = jnp.arange(Wp)[None, :, None]
    w_idx = jnp.arange(Wo)[None, None, :]
    kw_idx = jnp.arange(k)[:, None, None]
    P = (ip_idx == w_idx * stride + kw_idx).astype(jnp.float32)  # (k, Wp, Wo)

    # A[kh, ip*Cin+ci, w*Cout+co] = sum_kw P[kw,ip,w] * w_comb[kh,kw,ci,co]
    A = jnp.einsum('kpq,hkcd->hpcqd', P, w_comb).reshape(k, WpC, WoC)
    A = jnp.pad(A, ((0, 0), (0, WpC_pad - WpC), (0, WoC_pad - WoC)))
    A = A.reshape(k * WpC_pad, WoC_pad).astype(compute_dtype)

    b_comb = dw_b @ pw + pw_b                                  # (Cout,)
    b_tile = jnp.pad(jnp.tile(b_comb, Wo), (0, WoC_pad - WoC))
    b_tile = b_tile.reshape(1, WoC_pad).astype(jnp.float32)
    return A, b_tile


def sepconv_apply(x_nchw, A, b_tile, *, ksize, stride, padding, cout,
                  compute_dtype=jnp.float32):
    """Hot path: SepConv forward given pre-folded weights A / b_tile."""
    N, Cin, H, W = x_nchw.shape
    k = ksize
    Hp, Wp = H + 2 * padding, W + 2 * padding
    Ho = (Hp - k) // stride + 1
    Wo = (Wp - k) // stride + 1
    WpC, WoC = Wp * Cin, Wo * cout
    WpC_pad = _ceil_to(WpC, 128)
    WoC_pad = A.shape[1]
    assert A.shape[0] == k * WpC_pad

    # --- input: NCHW -> NHWC, spatial pad, fold (W,Cin) into lanes -----------
    x = jnp.transpose(x_nchw, (0, 2, 3, 1))
    xp = jnp.pad(x, ((0, 0), (padding, padding), (padding, padding), (0, 0)))
    xp = xp.reshape(N, Hp, WpC)
    xp = jnp.pad(xp, ((0, 0), (0, 0), (0, WpC_pad - WpC)))     # lane pad to 128k

    # Group H rows by residue mod stride so the kernel only does contiguous
    # reads:  xq[n, q, r*WpC_pad : (r+1)*WpC_pad] = xp[n, q*stride + r, :]
    Hq = -(-Hp // stride)
    xp = jnp.pad(xp, ((0, 0), (0, Hq * stride - Hp), (0, 0)))
    xq = xp.reshape(N, Hq, stride * WpC_pad).astype(compute_dtype)

    kernel = functools.partial(_sepconv_kernel, ksize=k, stride=stride,
                               wpc=WpC_pad, n_imgs=N, ho=Ho)

    # Actual MXU work of the selection-matrix formulation (advisory to XLA).
    flops = 2 * (N * Ho) * (k * WpC_pad) * WoC_pad
    itm_in = jnp.dtype(compute_dtype).itemsize
    itm_out = jnp.dtype(x_nchw.dtype).itemsize
    bytes_accessed = (xq.size * itm_in + A.size * A.dtype.itemsize
                      + b_tile.size * 4 + N * Ho * WoC_pad * itm_out)

    out = pl.pallas_call(
        kernel,
        out_shape=jax.ShapeDtypeStruct((N * Ho, WoC_pad), x_nchw.dtype),
        grid=(1,),
        in_specs=[
            pl.BlockSpec((N, Hq, stride * WpC_pad), lambda i: (0, 0, 0)),
            pl.BlockSpec((k * WpC_pad, WoC_pad), lambda i: (0, 0)),
            pl.BlockSpec((1, WoC_pad), lambda i: (0, 0)),
        ],
        out_specs=pl.BlockSpec((N * Ho, WoC_pad), lambda i: (0, 0)),
        compiler_params=pltpu.CompilerParams(
            dimension_semantics=("arbitrary",)),
        cost_estimate=pl.CostEstimate(flops=flops, transcendentals=0,
                                      bytes_accessed=bytes_accessed),
    )(xq, A, b_tile)

    # lane-dense (N*Ho, WoC_pad) -> NCHW
    out = out[:, :WoC].reshape(N, Ho, Wo, cout)
    return jnp.transpose(out, (0, 3, 1, 2))


def _reference(x_nchw, dw_w, dw_b, pw_w, pw_b, *, stride, padding):
    Cin = x_nchw.shape[1]
    y = jax.lax.conv_general_dilated(
        x_nchw, dw_w, (stride, stride),
        [(padding, padding), (padding, padding)],
        dimension_numbers=("NCHW", "OIHW", "NCHW"),
        feature_group_count=Cin) + dw_b[None, :, None, None]
    y = jax.lax.conv_general_dilated(
        y, pw_w, (1, 1), [(0, 0), (0, 0)],
        dimension_numbers=("NCHW", "OIHW", "NCHW")) + pw_b[None, :, None, None]
    return y


if __name__ == "__main__":
    # Module config: SepConv(in_channel=4, out_channel=8, kernel_size=3,
    #                        stride=1, padding=1)
    N, Cin, H, W = 2, 4, 16, 16
    Cout, K, PAD = 8, 3, 1

    key = jax.random.PRNGKey(0)
    kx, k1, k2, k3, k4 = jax.random.split(key, 5)
    x = jax.random.normal(kx, (N, Cin, H, W), jnp.float32)
    dw_w = jax.random.normal(k1, (Cin, 1, K, K), jnp.float32) * 0.2
    dw_b = jax.random.normal(k2, (Cin,), jnp.float32) * 0.1
    pw_w = jax.random.normal(k3, (Cout, Cin, 1, 1), jnp.float32) * 0.2
    pw_b = jax.random.normal(k4, (Cout,), jnp.float32) * 0.1

    def run(stride, compute_dtype):
        # Weight folding happens once, outside the (jitted) hot path.
        A, b_tile = sepconv_prepare(dw_w, dw_b, pw_w, pw_b, H=H, W=W,
                                    stride=stride, padding=PAD,
                                    compute_dtype=compute_dtype)
        fwd = jax.jit(functools.partial(sepconv_apply, ksize=K, stride=stride,
                                        padding=PAD, cout=Cout,
                                        compute_dtype=compute_dtype))
        return jax.block_until_ready(fwd(x, A, b_tile))

    # 1) Module config (stride=1), f32 operands.
    ref1 = _reference(x, dw_w, dw_b, pw_w, pw_b, stride=1, padding=PAD)
    out1 = run(1, jnp.float32)
    assert out1.shape == (N, Cout, H, W), out1.shape
    assert jnp.allclose(out1, ref1, rtol=1e-4, atol=1e-4), \
        float(jnp.max(jnp.abs(out1 - ref1)))

    # 2) stride=2 path (previously untested; exercised via the residue-grouped
    #    layout -- contiguous reads only).
    ref2 = _reference(x, dw_w, dw_b, pw_w, pw_b, stride=2, padding=PAD)
    out2 = run(2, jnp.float32)
    assert out2.shape == ref2.shape, (out2.shape, ref2.shape)
    assert jnp.allclose(out2, ref2, rtol=1e-4, atol=1e-4), \
        float(jnp.max(jnp.abs(out2 - ref2)))

    # 3) bf16 MXU operands (v6e/v7x full-rate path), f32 accumulation.
    out3 = run(1, jnp.bfloat16)
    assert jnp.allclose(out3, ref1, rtol=5e-2, atol=5e-2), \
        float(jnp.max(jnp.abs(out3 - ref1)))

    print("KERNEL_OK")
</pallas_src>

<mosaic_0001>
module attributes {stable_mosaic.version = 11 : i64} {
  func.func @_sepconv_kernel(%arg0: i32, %arg1: memref<2x18x128xf32, #tpu.memory_space<vmem>>, %arg2: memref<384x128xf32, #tpu.memory_space<vmem>>, %arg3: memref<1x128xf32, #tpu.memory_space<vmem>>, %arg4: memref<32x128xf32, #tpu.memory_space<vmem>>) attributes {dimension_semantics = [#tpu.dimension_semantics<arbitrary>], iteration_bounds = array<i64: 1>, scalar_prefetch = 0 : i64, scratch_operands = 0 : i64, tpu.core_type = #tpu.core_type<tc>, window_params = [{pipeline_mode = #tpu.pipeline_mode<synchronous>, transform_indices = @transform_0, window_bounds = array<i64: 2, 18, 128>}, {pipeline_mode = #tpu.pipeline_mode<synchronous>, transform_indices = @transform_1, window_bounds = array<i64: 384, 128>}, {pipeline_mode = #tpu.pipeline_mode<synchronous>, transform_indices = @transform_2, window_bounds = array<i64: 1, 128>}, {pipeline_mode = #tpu.pipeline_mode<synchronous>, transform_indices = @transform_3, window_bounds = array<i64: 32, 128>}]} {
    %c0 = arith.constant 0 : index
    %c0_0 = arith.constant 0 : index
    %c0_1 = arith.constant 0 : index
    %0 = vector.load %arg1[%c0, %c0_0, %c0_1] : memref<2x18x128xf32, #tpu.memory_space<vmem>>, vector<1x16x128xf32>
    %1 = vector.shape_cast %0 : vector<1x16x128xf32> to vector<16x128xf32>
    %c0_2 = arith.constant 0 : index
    %c1 = arith.constant 1 : index
    %c0_3 = arith.constant 0 : index
    %2 = vector.load %arg1[%c0_2, %c1, %c0_3] : memref<2x18x128xf32, #tpu.memory_space<vmem>>, vector<1x16x128xf32>
    %3 = vector.shape_cast %2 : vector<1x16x128xf32> to vector<16x128xf32>
    %c0_4 = arith.constant 0 : index
    %c2 = arith.constant 2 : index
    %c0_5 = arith.constant 0 : index
    %4 = vector.load %arg1[%c0_4, %c2, %c0_5] : memref<2x18x128xf32, #tpu.memory_space<vmem>>, vector<1x16x128xf32>
    %5 = vector.shape_cast %4 : vector<1x16x128xf32> to vector<16x128xf32>
    %6 = tpu.concatenate %1, %3, %5 in 1 : vector<16x128xf32>, vector<16x128xf32>, vector<16x128xf32> -> vector<16x384xf32>
    %c1_6 = arith.constant 1 : index
    %c0_7 = arith.constant 0 : index
    %c0_8 = arith.constant 0 : index
    %7 = vector.load %arg1[%c1_6, %c0_7, %c0_8] : memref<2x18x128xf32, #tpu.memory_space<vmem>>, vector<1x16x128xf32>
    %8 = vector.shape_cast %7 : vector<1x16x128xf32> to vector<16x128xf32>
    %c1_9 = arith.constant 1 : index
    %c1_10 = arith.constant 1 : index
    %c0_11 = arith.constant 0 : index
    %9 = vector.load %arg1[%c1_9, %c1_10, %c0_11] : memref<2x18x128xf32, #tpu.memory_space<vmem>>, vector<1x16x128xf32>
    %10 = vector.shape_cast %9 : vector<1x16x128xf32> to vector<16x128xf32>
    %c1_12 = arith.constant 1 : index
    %c2_13 = arith.constant 2 : index
    %c0_14 = arith.constant 0 : index
    %11 = vector.load %arg1[%c1_12, %c2_13, %c0_14] : memref<2x18x128xf32, #tpu.memory_space<vmem>>, vector<1x16x128xf32>
    %12 = vector.shape_cast %11 : vector<1x16x128xf32> to vector<16x128xf32>
    %13 = tpu.concatenate %8, %10, %12 in 1 : vector<16x128xf32>, vector<16x128xf32>, vector<16x128xf32> -> vector<16x384xf32>
    %14 = tpu.concatenate %6, %13 in 0 : vector<16x384xf32>, vector<16x384xf32> -> vector<32x384xf32>
    %c0_15 = arith.constant 0 : index
    %c0_16 = arith.constant 0 : index
    %15 = vector.load %arg2[%c0_15, %c0_16] : memref<384x128xf32, #tpu.memory_space<vmem>>, vector<384x128xf32>
    %cst = arith.constant dense<0.000000e+00> : vector<32x128xf32>
    %16 = tpu.matmul %14, %15, %cst {dimension_numbers = #tpu.dot_dimension_numbers<[1], [0], [0], [1], [0, 0, 1, 1], [], []>} : vector<32x384xf32>, vector<384x128xf32>, vector<32x128xf32> -> vector<32x128xf32>
    %c0_17 = arith.constant 0 : index
    %c0_18 = arith.constant 0 : index
    %17 = vector.load %arg3[%c0_17, %c0_18] : memref<1x128xf32, #tpu.memory_space<vmem>>, vector<1x128xf32>
    %18 = vector.broadcast %17 : vector<1x128xf32> to vector<32x128xf32>
    %19 = arith.addf %16, %18 : vector<32x128xf32>
    %c0_19 = arith.constant 0 : index
    %c0_20 = arith.constant 0 : index
    %20 = vector.load %arg4[%c0_19, %c0_20] : memref<32x128xf32, #tpu.memory_space<vmem>>, vector<32x128xf32>
    tpu.vector_store %arg4[%c0_19, %c0_20], %19 {strides = array<i32>} : memref<32x128xf32, #tpu.memory_space<vmem>>, vector<32x128xf32>,
    return
  }
  func.func @transform_0(%arg0: i32) -> (i32, i32, i32) {
    %c0_i32 = arith.constant 0 : i32
    %c0_i32_0 = arith.constant 0 : i32
    %c0_i32_1 = arith.constant 0 : i32
    %c0_i32_2 = arith.constant 0 : i32
    return %c0_i32, %c0_i32_0, %c0_i32_1 : i32, i32, i32
  }
  func.func @transform_1(%arg0: i32) -> (i32, i32) {
    %c0_i32 = arith.constant 0 : i32
    %c0_i32_0 = arith.constant 0 : i32
    %c0_i32_1 = arith.constant 0 : i32
    return %c0_i32, %c0_i32_0 : i32, i32
  }
  func.func @transform_2(%arg0: i32) -> (i32, i32) {
    %c0_i32 = arith.constant 0 : i32
    %c0_i32_0 = arith.constant 0 : i32
    %c0_i32_1 = arith.constant 0 : i32
    return %c0_i32, %c0_i32_0 : i32, i32
  }
  func.func @transform_3(%arg0: i32) -> (i32, i32) {
    %c0_i32 = arith.constant 0 : i32
    %c0_i32_0 = arith.constant 0 : i32
    %c0_i32_1 = arith.constant 0 : i32
    return %c0_i32, %c0_i32_0 : i32, i32
  }
}

</mosaic_0001>

<llo_original>
// kernel: sepconv_apply.1
$region0: #{sepconv_apply.1}
  #allocation0 [shape = 'u32[]', space=smem, size = 0x4, offset = 0x4, fixed_abs, tag = 'smem constant byte address 0x4 - core index']
  #allocation1 [shape = 'u32[144,128]{1,0:T(1,128)}', space=vmem, size = 0x12000, scoped, tag = 'internal scratch']
  %s0 = inlined_call_operand.vmem [shape: f32[2,18,128], index: 0, kind: input, shape index: {}]
  %s1 = inlined_call_operand.vmem [shape: f32[384,128], index: 1, kind: input, shape index: {}]
  %s2 = inlined_call_operand.vmem [shape: f32[1,128], index: 2, kind: input, shape index: {}]
  %s3 = inlined_call_operand.vmem [shape: f32[32,128], index: 3, kind: output, shape index: {}]
  %s4 = sld [smem:[#allocation0]]
  $region22: #{sepconv_apply.1} parent=0
    _
  %s6 = ssub.s32 1, %s4
  %s7 = scalar_select 0, %s6, %s4
  // Predicated region
  $region2: #{sepconv_apply.1} parent=0 // pred_check
    _
  $region3: #{sepconv_apply.1} parent=0 // pred_check_branch
    %9 = sbr.rel (0) target = $region5
  $region4: #{sepconv_apply.1} parent=0 // pred_region
    _
  $region5: #{sepconv_apply.1} parent=0 // pred_fallthru
    _
  // Predicated region
  $region6: #{sepconv_apply.1} parent=0 // pred_check
    _
  $region7: #{sepconv_apply.1} parent=0 // pred_check_branch
    %11 = sbr.rel (0) target = $region9
  $region8: #{sepconv_apply.1} parent=0 // pred_region
    _
  $region9: #{sepconv_apply.1} parent=0 // pred_fallthru
    _
  // Predicated region
  $region10: #{sepconv_apply.1} parent=0 // pred_check
    _
  $region11: #{sepconv_apply.1} parent=0 // pred_check_branch
    %13 = sbr.rel (0) target = $region13
  $region12: #{sepconv_apply.1} parent=0 // pred_region
    _
  $region13: #{sepconv_apply.1} parent=0 // pred_fallthru
    _
  %v14 = vld [vmem:[%s0] sm:$0xff]
  %v15 = vld [vmem:[%s0 + $0x8] sm:$0xff]
  %v16 = vld [vmem:[%s0 + $0x1] sm:$0xff]
  %v17 = vld [vmem:[%s0 + $0x9] sm:$0xff]
  %v18 = vld [vmem:[%s0 + $0x2] sm:$0xff]
  %v19 = vld [vmem:[%s0 + $0xa] sm:$0xff]
  %s20 = scalar_lea.vmem %s0, 24
  %v21 = vld [vmem:[%s20] sm:$0xff]
  %v22 = vld [vmem:[%s20 + $0x8] sm:$0xff]
  %v23 = vld [vmem:[%s20 + $0x1] sm:$0xff]
  %v24 = vld [vmem:[%s20 + $0x9] sm:$0xff]
  %v25 = vld [vmem:[%s20 + $0x2] sm:$0xff]
  %v26 = vld [vmem:[%s20 + $0xa] sm:$0xff]
  %v27 = vld [vmem:[%s1] sm:$0xff]
  %v28 = vld [vmem:[%s1 + $0x8] sm:$0xff]
  %v29 = vld [vmem:[%s1 + $0x10] sm:$0xff]
  %v30 = vld [vmem:[%s1 + $0x18] sm:$0xff]
  %v31 = vld [vmem:[%s1 + $0x20] sm:$0xff]
  %v32 = vld [vmem:[%s1 + $0x28] sm:$0xff]
  %v33 = vld [vmem:[%s1 + $0x30] sm:$0xff]
  %v34 = vld [vmem:[%s1 + $0x38] sm:$0xff]
  %v35 = vld [vmem:[%s1 + $0x40] sm:$0xff]
  %v36 = vld [vmem:[%s1 + $0x48] sm:$0xff]
  %v37 = vld [vmem:[%s1 + $0x50] sm:$0xff]
  %v38 = vld [vmem:[%s1 + $0x58] sm:$0xff]
  %v39 = vld [vmem:[%s1 + $0x60] sm:$0xff]
  %v40 = vld [vmem:[%s1 + $0x68] sm:$0xff]
  %v41 = vld [vmem:[%s1 + $0x70] sm:$0xff]
  %v42 = vld [vmem:[%s1 + $0x78] sm:$0xff]
  %v43 = vld [vmem:[%s1 + $0x80] sm:$0xff]
  %v44 = vld [vmem:[%s1 + $0x88] sm:$0xff]
  %v45 = vld [vmem:[%s1 + $0x90] sm:$0xff]
  %v46 = vld [vmem:[%s1 + $0x98] sm:$0xff]
  %v47 = vld [vmem:[%s1 + $0xa0] sm:$0xff]
  %v48 = vld [vmem:[%s1 + $0xa8] sm:$0xff]
  %v49 = vld [vmem:[%s1 + $0xb0] sm:$0xff]
  %v50 = vld [vmem:[%s1 + $0xb8] sm:$0xff]
  %v51 = vld [vmem:[%s1 + $0xc0] sm:$0xff]
  %v52 = vld [vmem:[%s1 + $0xc8] sm:$0xff]
  %v53 = vld [vmem:[%s1 + $0xd0] sm:$0xff]
  %v54 = vld [vmem:[%s1 + $0xd8] sm:$0xff]
  %v55 = vld [vmem:[%s1 + $0xe0] sm:$0xff]
  %v56 = vld [vmem:[%s1 + $0xe8] sm:$0xff]
  %v57 = vld [vmem:[%s1 + $0xf0] sm:$0xff]
  %v58 = vld [vmem:[%s1 + $0xf8] sm:$0xff]
  %v59 = vld [vmem:[%s1 + $0x100] sm:$0xff]
  %v60 = vld [vmem:[%s1 + $0x108] sm:$0xff]
  %v61 = vld [vmem:[%s1 + $0x110] sm:$0xff]
  %v62 = vld [vmem:[%s1 + $0x118] sm:$0xff]
  %v63 = vld [vmem:[%s1 + $0x120] sm:$0xff]
  %v64 = vld [vmem:[%s1 + $0x128] sm:$0xff]
  %v65 = vld [vmem:[%s1 + $0x130] sm:$0xff]
  %v66 = vld [vmem:[%s1 + $0x138] sm:$0xff]
  %v67 = vld [vmem:[%s1 + $0x140] sm:$0xff]
  %v68 = vld [vmem:[%s1 + $0x148] sm:$0xff]
  %v69 = vld [vmem:[%s1 + $0x150] sm:$0xff]
  %v70 = vld [vmem:[%s1 + $0x158] sm:$0xff]
  %v71 = vld [vmem:[%s1 + $0x160] sm:$0xff]
  %v72 = vld [vmem:[%s1 + $0x168] sm:$0xff]
  %v73 = vld [vmem:[%s1 + $0x170] sm:$0xff]
  %v74 = vld [vmem:[%s1 + $0x178] sm:$0xff]
  %v75 = vld [vmem:[%s2] sm:$0x1]
  %v77 = vlaneseq
  %v78 = vshrl.u32 %v77, 7
  %v79 = vsub.s32 0, %v78
  %v80 = vrot.slane %v75, %v79
  %82 = vmatprep.subr.mxu0 0.0
  %83 = vmatpush1.msra.mxu0 %v27
  %84 = vmatprep.subr.mxu0 0.0
  %85 = vmatpush1.msra.mxu0 %v28
  %86 = vmatprep.subr.mxu0 0.0
  %87 = vmatpush1.msra.mxu0 %v29
  %88 = vmatprep.subr.mxu0 0.0
  %89 = vmatpush1.msra.mxu0 %v30
  %90 = vmatprep.subr.mxu0 0.0
  %91 = vmatpush1.msra.mxu0 %v31
  %92 = vmatprep.subr.mxu0 0.0
  %93 = vmatpush1.msra.mxu0 %v32
  %94 = vmatprep.subr.mxu0 0.0
  %95 = vmatpush1.msra.mxu0 %v33
  %96 = vmatprep.subr.mxu0 0.0
  %97 = vmatpush1.msra.mxu0 %v34
  %98 = vmatprep.subr.mxu0 0.0
  %99 = vmatpush1.msra.mxu0 %v35
  %100 = vmatprep.subr.mxu0 0.0
  %101 = vmatpush1.msra.mxu0 %v36
  %102 = vmatprep.subr.mxu0 0.0
  %103 = vmatpush1.msra.mxu0 %v37
  %104 = vmatprep.subr.mxu0 0.0
  %105 = vmatpush1.msra.mxu0 %v38
  %106 = vmatprep.subr.mxu0 0.0
  %107 = vmatpush1.msra.mxu0 %v39
  %108 = vmatprep.subr.mxu0 0.0
  %109 = vmatpush1.msra.mxu0 %v40
  %110 = vmatprep.subr.mxu0 0.0
  %111 = vmatpush1.msra.mxu0 %v41
  %112 = vmatprep.subr.mxu0 0.0
  %113 = vmatpush1.msra.mxu0 %v42
  %114 = vmatprep.subr.mxu0 0.0
  %115 = vmatpush1.msra.mxu0 %v43
  %116 = vmatprep.subr.mxu0 0.0
  %117 = vmatpush1.msra.mxu0 %v44
  %118 = vmatprep.subr.mxu0 0.0
  %119 = vmatpush1.msra.mxu0 %v45
  %120 = vmatprep.subr.mxu0 0.0
  %121 = vmatpush1.msra.mxu0 %v46
  %122 = vmatprep.subr.mxu0 0.0
  %123 = vmatpush1.msra.mxu0 %v47
  %124 = vmatprep.subr.mxu0 0.0
  %125 = vmatpush1.msra.mxu0 %v48
  %126 = vmatprep.subr.mxu0 0.0
  %127 = vmatpush1.msra.mxu0 %v49
  %128 = vmatprep.subr.mxu0 0.0
  %129 = vmatpush1.msra.mxu0 %v50
  %130 = vmatprep.subr.mxu0 0.0
  %131 = vmatpush1.msra.mxu0 %v51
  %132 = vmatprep.subr.mxu0 0.0
  %133 = vmatpush1.msra.mxu0 %v52
  %134 = vmatprep.subr.mxu0 0.0
  %135 = vmatpush1.msra.mxu0 %v53
  %136 = vmatprep.subr.mxu0 0.0
  %137 = vmatpush1.msra.mxu0 %v54
  %138 = vmatprep.subr.mxu0 0.0
  %139 = vmatpush1.msra.mxu0 %v55
  %140 = vmatprep.subr.mxu0 0.0
  %141 = vmatpush1.msra.mxu0 %v56
  %142 = vmatprep.subr.mxu0 0.0
  %143 = vmatpush1.msra.mxu0 %v57
  %144 = vmatprep.subr.mxu0 0.0
  %145 = vmatpush1.msra.mxu0 %v58
  %146 = vmatprep.mubr.f32.mxu0 %v16
  %147 = vmatmul.mubr.f32.gmra.mrb[0].mxu0 %v14
  %v148 = vpop.f32.mrb[0].mxu0
  %v149 = vadd.f32 %v80, %v148
  %v150 = vpop.f32.mrb[0].mxu0
  %151 = vmatprep.mubr.f32.mxu0 %v17
  %152 = vmatmul.mubr.f32.gmra.mrb[0].mxu0 %v15
  %v153 = vpop.f32.mrb[0].mxu0
  %v154 = vadd.f32 %v80, %v153
  %v155 = vpop.f32.mrb[0].mxu0
  %156 = vmatprep.mubr.f32.mxu0 %v23
  %157 = vmatmul.mubr.f32.gmra.mrb[0].mxu0 %v21
  %v158 = vpop.f32.mrb[0].mxu0
  %v159 = vadd.f32 %v80, %v158
  %v160 = vpop.f32.mrb[0].mxu0
  %161 = vmatprep.mubr.f32.mxu0 %v24
  %162 = vmatmul.mubr.f32.gmra.mrb[0].mxu0 %v22
  %v163 = vpop.f32.mrb[0].mxu0
  %v164 = vadd.f32 %v80, %v163
  %v165 = vpop.f32.mrb[0].mxu0
  %166 = vdwg.mxu0
  %167 = vmatprep.subr.mxu0 0.0
  %168 = vmatpush1.msra.mxu0 %v59
  %169 = vmatprep.subr.mxu0 0.0
  %170 = vmatpush1.msra.mxu0 %v60
  %171 = vmatprep.subr.mxu0 0.0
  %172 = vmatpush1.msra.mxu0 %v61
  %173 = vmatprep.subr.mxu0 0.0
  %174 = vmatpush1.msra.mxu0 %v62
  %175 = vmatprep.subr.mxu0 0.0
  %176 = vmatpush1.msra.mxu0 %v63
  %177 = vmatprep.subr.mxu0 0.0
  %178 = vmatpush1.msra.mxu0 %v64
  %179 = vmatprep.subr.mxu0 0.0
  %180 = vmatpush1.msra.mxu0 %v65
  %181 = vmatprep.subr.mxu0 0.0
  %182 = vmatpush1.msra.mxu0 %v66
  %183 = vmatprep.subr.mxu0 0.0
  %184 = vmatpush1.msra.mxu0 %v67
  %185 = vmatprep.subr.mxu0 0.0
  %186 = vmatpush1.msra.mxu0 %v68
  %187 = vmatprep.subr.mxu0 0.0
  %188 = vmatpush1.msra.mxu0 %v69
  %189 = vmatprep.subr.mxu0 0.0
  %190 = vmatpush1.msra.mxu0 %v70
  %191 = vmatprep.subr.mxu0 0.0
  %192 = vmatpush1.msra.mxu0 %v71
  %193 = vmatprep.subr.mxu0 0.0
  %194 = vmatpush1.msra.mxu0 %v72
  %195 = vmatprep.subr.mxu0 0.0
  %196 = vmatpush1.msra.mxu0 %v73
  %197 = vmatprep.subr.mxu0 0.0
  %198 = vmatpush1.msra.mxu0 %v74
  %199 = vmatprep.subr.mxu0 0.0
  %200 = vmatpush1.msra.mxu0 0.0
  %201 = vmatprep.subr.mxu0 0.0
  %202 = vmatpush1.msra.mxu0 0.0
  %203 = vmatprep.subr.mxu0 0.0
  %204 = vmatpush1.msra.mxu0 0.0
  %205 = vmatprep.subr.mxu0 0.0
  %206 = vmatpush1.msra.mxu0 0.0
  %207 = vmatprep.subr.mxu0 0.0
  %208 = vmatpush1.msra.mxu0 0.0
  %209 = vmatprep.subr.mxu0 0.0
  %210 = vmatpush1.msra.mxu0 0.0
  %211 = vmatprep.subr.mxu0 0.0
  %212 = vmatpush1.msra.mxu0 0.0
  %213 = vmatprep.subr.mxu0 0.0
  %214 = vmatpush1.msra.mxu0 0.0
  %215 = vmatprep.subr.mxu0 0.0
  %216 = vmatpush1.msra.mxu0 0.0
  %217 = vmatprep.subr.mxu0 0.0
  %218 = vmatpush1.msra.mxu0 0.0
  %219 = vmatprep.subr.mxu0 0.0
  %220 = vmatpush1.msra.mxu0 0.0
  %221 = vmatprep.subr.mxu0 0.0
  %222 = vmatpush1.msra.mxu0 0.0
  %223 = vmatprep.subr.mxu0 0.0
  %224 = vmatpush1.msra.mxu0 0.0
  %225 = vmatprep.subr.mxu0 0.0
  %226 = vmatpush1.msra.mxu0 0.0
  %227 = vmatprep.subr.mxu0 0.0
  %228 = vmatpush1.msra.mxu0 0.0
  %229 = vmatprep.subr.mxu0 0.0
  %230 = vmatpush1.msra.mxu0 0.0
  %231 = vmatprep.mubr.f32.mxu0 0.0
  %232 = vmatmul.mubr.f32.gmra.mrb[0].mxu0 %v18
  %v233 = vpop.f32.mrb[0].mxu0
  %v234 = vadd.f32 %v149, %v233
  %v235 = vpop.f32.mrb[0].mxu0
  %236 = vmatprep.mubr.f32.mxu0 0.0
  %237 = vmatmul.mubr.f32.gmra.mrb[0].mxu0 %v19
  %v238 = vpop.f32.mrb[0].mxu0
  %v239 = vadd.f32 %v154, %v238
  %v240 = vpop.f32.mrb[0].mxu0
  %241 = vmatprep.mubr.f32.mxu0 0.0
  %242 = vmatmul.mubr.f32.gmra.mrb[0].mxu0 %v25
  %v243 = vpop.f32.mrb[0].mxu0
  %v244 = vadd.f32 %v159, %v243
  %v245 = vpop.f32.mrb[0].mxu0
  %246 = vmatprep.mubr.f32.mxu0 0.0
  %247 = vmatmul.mubr.f32.gmra.mrb[0].mxu0 %v26
  %v248 = vpop.f32.mrb[0].mxu0
  %v249 = vadd.f32 %v164, %v248
  %v250 = vpop.f32.mrb[0].mxu0
  %251 = vdwg.mxu0
  %252 = vst [vmem:[%s3] sm:$0xff] %v234
  %253 = vst [vmem:[%s3 + $0x8] sm:$0xff] %v239
  %254 = vst [vmem:[%s3 + $0x10] sm:$0xff] %v244
  %255 = vst [vmem:[%s3 + $0x18] sm:$0xff] %v249
  // Predicated region
  $region14: #{sepconv_apply.1} parent=0 // pred_check
    _
  $region15: #{sepconv_apply.1} parent=0 // pred_check_branch
    %257 = sbr.rel (0) target = $region17
  $region16: #{sepconv_apply.1} parent=0 // pred_region
    _
  $region17: #{sepconv_apply.1} parent=0 // pred_fallthru
    _
  // Predicated region
  $region18: #{sepconv_apply.1} parent=0 // pred_check
    _
  $region19: #{sepconv_apply.1} parent=0 // pred_check_branch
    %259 = sbr.rel (0) target = $region21
  $region20: #{sepconv_apply.1} parent=0 // pred_region
    _
  $region21: #{sepconv_apply.1} parent=0 // pred_fallthru
    _

</llo_original>
